<compile_context>
chip_gen: v7x
topology: tpu7x:2x2x1
jax: 0.10.0
libtpu: 0.0.40
codegen_flags: <defaults>
</compile_context>

<pallas_src>
import jax
import jax.numpy as jnp
from jax.experimental import pallas as pl
from jax.experimental.pallas import tpu as pltpu

OUT_PAD = 8    # 3 logits padded to 8 lanes: tiny masked store, ~32 B/row writeback
SUBLANE = 16   # bf16 sublane packing: batch rows padded/tiled in multiples of 16


def _round_up(x, m):
    return ((x + m - 1) // m) * m


def actor_mlp_kernel(x_ref, w1_ref, b1_ref, w2_ref, b2_ref, w3_ref, b3_ref, o_ref):
    """[TB,16] bf16 -> linear1 -> ReLU -> linear2 -> ReLU -> linear3 -> [TB,8] f32.

    MXU operands are bf16; accumulation, bias add and ReLU stay in f32.
    w3/b3 arrive zero-padded to OUT_PAD lanes; real logits are lanes 0..2.
    """
    x = x_ref[...]                                                       # bf16 [TB, 16]
    h1 = jnp.dot(x, w1_ref[...], preferred_element_type=jnp.float32) + b1_ref[...]
    h1 = jnp.maximum(h1, 0.0)                                            # ReLU (f32)
    h2 = jnp.dot(h1.astype(jnp.bfloat16), w2_ref[...],
                 preferred_element_type=jnp.float32) + b2_ref[...]
    h2 = jnp.maximum(h2, 0.0)                                            # ReLU (f32)
    out = jnp.dot(h2.astype(jnp.bfloat16), w3_ref[...],
                  preferred_element_type=jnp.float32) + b3_ref[...]
    o_ref[...] = out.astype(o_ref.dtype)                                 # [TB, OUT_PAD]


def _flatten_inputs(o, w, noPitchTime, dodgeTime, dodgeDirection, dtype=jnp.float32):
    """torch.cat((o.flatten(1,2), w, noPitchTime[:,None], dodgeTime[:,None],
    dodgeDirection), 1) equivalent, assembled directly in `dtype`."""
    B = o.shape[0]
    return jnp.concatenate(
        [o.reshape(B, -1).astype(dtype),
         w.astype(dtype),
         noPitchTime[:, None].astype(dtype),
         dodgeTime[:, None].astype(dtype),
         dodgeDirection.astype(dtype)],
        axis=1,
    )


def actor_forward(o, w, noPitchTime, dodgeTime, dodgeDirection, params,
                  *, tile_b=4096, force_pallas=False):
    """Mirrors Actor.forward. Returns [B, 3] f32 logits."""
    B = o.shape[0]
    w1, b1, w2, b2, w3, b3 = params
    H1 = w1.shape[1]
    H2 = w2.shape[1]
    n_out = w3.shape[1]

    # Tiny-batch regime: pallas_call launch overhead dwarfs ~3K flops of work.
    # (This path is exact f32; the Pallas path uses bf16 MXU operands.)
    if B < 256 and not force_pallas:
        flat = _flatten_inputs(o, w, noPitchTime, dodgeTime, dodgeDirection,
                               jnp.float32)
        h1 = jnp.maximum(flat @ w1 + b1, 0.0)
        h2 = jnp.maximum(h1 @ w2 + b2, 0.0)
        return h2 @ w3 + b3

    # Assemble the 16-wide activation row directly in bf16 (no f32 intermediate).
    x = _flatten_inputs(o, w, noPitchTime, dodgeTime, dodgeDirection, jnp.bfloat16)
    assert x.shape[1] == 16, x.shape

    # Narrow output head: pad the 3-wide projection to 8 lanes only.
    w3p = jnp.zeros((H2, OUT_PAD), jnp.float32).at[:, :n_out].set(w3)
    b3p = jnp.zeros((1, OUT_PAD), jnp.float32).at[:, :n_out].set(b3)

    # bf16 MXU operands; biases stay f32 (added in f32 inside the kernel).
    w1b = w1.astype(jnp.bfloat16)
    w2b = w2.astype(jnp.bfloat16)
    w3b = w3p.astype(jnp.bfloat16)

    # Pad the batch only to the bf16 sublane multiple; Pallas masks the
    # trailing partial tile (OOB reads unused, OOB writes dropped).
    B_pad = _round_up(B, SUBLANE)
    if B_pad != B:
        x = jnp.pad(x, ((0, B_pad - B), (0, 0)))

    tile = _round_up(max(tile_b, SUBLANE), SUBLANE)
    # Keep >= 2 grid blocks when there's enough work so the "parallel" batch
    # axis can shard across both TensorCores on v7x.
    half = _round_up(pl.cdiv(B_pad, 2), SUBLANE)
    tile = max(SUBLANE, min(tile, half, B_pad))
    grid = (pl.cdiv(B_pad, tile),)

    flops = 2 * B_pad * (16 * H1 + H1 * H2 + H2 * OUT_PAD)
    bytes_accessed = (B_pad * 16 * 2                          # bf16 activation stream in
                      + B_pad * OUT_PAD * 4                   # f32 narrow output
                      + (16 * H1 + H1 * H2 + H2 * OUT_PAD) * 2  # bf16 weights (resident)
                      + (H1 + H2 + OUT_PAD) * 4)                # f32 biases

    out = pl.pallas_call(
        actor_mlp_kernel,
        out_shape=jax.ShapeDtypeStruct((B_pad, OUT_PAD), jnp.float32),
        grid=grid,
        in_specs=[
            pl.BlockSpec((tile, 16), lambda i: (i, 0)),      # streamed activations
            pl.BlockSpec((16, H1), lambda i: (0, 0)),        # weights: VMEM-resident
            pl.BlockSpec((1, H1), lambda i: (0, 0)),
            pl.BlockSpec((H1, H2), lambda i: (0, 0)),
            pl.BlockSpec((1, H2), lambda i: (0, 0)),
            pl.BlockSpec((H2, OUT_PAD), lambda i: (0, 0)),
            pl.BlockSpec((1, OUT_PAD), lambda i: (0, 0)),
        ],
        out_specs=pl.BlockSpec((tile, OUT_PAD), lambda i: (i, 0)),
        compiler_params=pltpu.CompilerParams(
            dimension_semantics=("parallel",),        # megacore sharding on v7x
            vmem_limit_bytes=32 * 1024 * 1024,        # safe on v7x's 64 MiB VMEM
        ),
        cost_estimate=pl.CostEstimate(
            flops=flops, transcendentals=0, bytes_accessed=bytes_accessed),
    )(x, w1b, b1, w2b, b2, w3b, b3p)

    return out[:B, :n_out]


def init_params(hidden_size, hidden_size_2, key):
    """Deterministic synthetic params. Weights stored as [in, out] (x @ W + b)."""
    k1, k2, k3, k4, k5, k6 = jax.random.split(key, 6)
    w1 = jax.random.normal(k1, (16, hidden_size), jnp.float32) * 0.1
    b1 = jax.random.normal(k2, (1, hidden_size), jnp.float32) * 0.1
    w2 = jax.random.normal(k3, (hidden_size, hidden_size_2), jnp.float32) * 0.1
    b2 = jax.random.normal(k4, (1, hidden_size_2), jnp.float32) * 0.1
    w3 = jax.random.normal(k5, (hidden_size_2, 3), jnp.float32) * 0.1
    b3 = jax.random.normal(k6, (1, 3), jnp.float32) * 0.1
    return (w1, b1, w2, b2, w3, b3)


def reference_forward(o, w, noPitchTime, dodgeTime, dodgeDirection, params):
    """Pure-JAX f32 reference for verification."""
    x = _flatten_inputs(o, w, noPitchTime, dodgeTime, dodgeDirection, jnp.float32)
    w1, b1, w2, b2, w3, b3 = params
    h1 = jnp.maximum(x @ w1 + b1, 0.0)
    h2 = jnp.maximum(h1 @ w2 + b2, 0.0)
    return h2 @ w3 + b3


def _make_inputs(B, key):
    ko, kw, kn, kd, kdd = jax.random.split(key, 5)
    # Feature budget: o(B,3,3)->9, w(B,3)->3, noPitchTime->1, dodgeTime->1,
    # dodgeDirection(B,2)->2 ; total = 16 (matches Linear(16, hidden_size)).
    o = jax.random.normal(ko, (B, 3, 3), jnp.float32)
    w = jax.random.normal(kw, (B, 3), jnp.float32)
    noPitchTime = jax.random.normal(kn, (B,), jnp.float32)
    dodgeTime = jax.random.normal(kd, (B,), jnp.float32)
    dodgeDirection = jax.random.normal(kdd, (B, 2), jnp.float32)
    return o, w, noPitchTime, dodgeTime, dodgeDirection


if __name__ == "__main__":
    key = jax.random.PRNGKey(0)
    kp, kin1, kin2 = jax.random.split(key, 3)

    hidden_size = 32
    hidden_size_2 = 32
    params = init_params(hidden_size, hidden_size_2, kp)

    # --- small batch (B=2): force the Pallas path so the kernel is exercised.
    B = 2
    inputs = _make_inputs(B, kin1)
    ref = reference_forward(*inputs, params)
    out = actor_forward(*inputs, params, force_pallas=True)
    out = jax.block_until_ready(out)
    assert out.shape == (B, 3), out.shape
    # bf16 MXU operands -> relaxed tolerance vs the f32 reference.
    assert jnp.allclose(out, ref, atol=3e-2, rtol=3e-2), (out, ref)

    # Tiny-batch fast path (pure XLA) must match the reference exactly.
    out_small = actor_forward(*inputs, params)
    out_small = jax.block_until_ready(out_small)
    assert jnp.allclose(out_small, ref, atol=1e-5, rtol=1e-5), (out_small, ref)

    # --- non-tile-aligned batch (B=200): exercises sublane padding + the
    # masked trailing partial grid block.
    B2 = 200
    inputs2 = _make_inputs(B2, kin2)
    ref2 = reference_forward(*inputs2, params)
    out2 = actor_forward(*inputs2, params, force_pallas=True)
    out2 = jax.block_until_ready(out2)
    assert out2.shape == (B2, 3), out2.shape
    assert jnp.allclose(out2, ref2, atol=3e-2, rtol=3e-2)

    print("KERNEL_OK")
</pallas_src>

<mosaic_0001>
module attributes {stable_mosaic.version = 11 : i64} {
  func.func @actor_mlp_kernel(%arg0: i32, %arg1: memref<16x16xbf16, #tpu.memory_space<vmem>>, %arg2: memref<16x32xbf16, #tpu.memory_space<vmem>>, %arg3: memref<1x32xf32, #tpu.memory_space<vmem>>, %arg4: memref<32x32xbf16, #tpu.memory_space<vmem>>, %arg5: memref<1x32xf32, #tpu.memory_space<vmem>>, %arg6: memref<32x8xbf16, #tpu.memory_space<vmem>>, %arg7: memref<1x8xf32, #tpu.memory_space<vmem>>, %arg8: memref<16x8xf32, #tpu.memory_space<vmem>>) attributes {dimension_semantics = [#tpu.dimension_semantics<parallel>], iteration_bounds = array<i64: 1>, scalar_prefetch = 0 : i64, scratch_operands = 0 : i64, tpu.core_type = #tpu.core_type<tc>, window_params = [{transform_indices = @transform_0, window_bounds = array<i64: 16, 16>}, {pipeline_mode = #tpu.pipeline_mode<synchronous>, transform_indices = @transform_1, window_bounds = array<i64: 16, 32>}, {pipeline_mode = #tpu.pipeline_mode<synchronous>, transform_indices = @transform_2, window_bounds = array<i64: 1, 32>}, {pipeline_mode = #tpu.pipeline_mode<synchronous>, transform_indices = @transform_3, window_bounds = array<i64: 32, 32>}, {pipeline_mode = #tpu.pipeline_mode<synchronous>, transform_indices = @transform_4, window_bounds = array<i64: 1, 32>}, {pipeline_mode = #tpu.pipeline_mode<synchronous>, transform_indices = @transform_5, window_bounds = array<i64: 32, 8>}, {pipeline_mode = #tpu.pipeline_mode<synchronous>, transform_indices = @transform_6, window_bounds = array<i64: 1, 8>}, {transform_indices = @transform_7, window_bounds = array<i64: 16, 8>}]} {
    %c0 = arith.constant 0 : index
    %c0_0 = arith.constant 0 : index
    %0 = vector.load %arg1[%c0, %c0_0] : memref<16x16xbf16, #tpu.memory_space<vmem>>, vector<16x16xbf16>
    %c0_1 = arith.constant 0 : index
    %c0_2 = arith.constant 0 : index
    %1 = vector.load %arg2[%c0_1, %c0_2] : memref<16x32xbf16, #tpu.memory_space<vmem>>, vector<16x32xbf16>
    %cst = arith.constant dense<0.000000e+00> : vector<16x32xf32>
    %2 = tpu.matmul %0, %1, %cst {dimension_numbers = #tpu.dot_dimension_numbers<[1], [0], [0], [1], [0, 0, 1, 1], [], []>} : vector<16x16xbf16>, vector<16x32xbf16>, vector<16x32xf32> -> vector<16x32xf32>
    %c0_3 = arith.constant 0 : index
    %c0_4 = arith.constant 0 : index
    %3 = vector.load %arg3[%c0_3, %c0_4] : memref<1x32xf32, #tpu.memory_space<vmem>>, vector<1x32xf32>
    %4 = vector.broadcast %3 : vector<1x32xf32> to vector<16x32xf32>
    %5 = arith.addf %2, %4 : vector<16x32xf32>
    %cst_5 = arith.constant 0.000000e+00 : f32
    %6 = vector.broadcast %cst_5 : f32 to vector<16x32xf32>
    %7 = arith.maximumf %5, %6 : vector<16x32xf32>
    %8 = arith.truncf %7 : vector<16x32xf32> to vector<16x32xbf16>
    %c0_6 = arith.constant 0 : index
    %c0_7 = arith.constant 0 : index
    %9 = vector.load %arg4[%c0_6, %c0_7] : memref<32x32xbf16, #tpu.memory_space<vmem>>, vector<32x32xbf16>
    %cst_8 = arith.constant dense<0.000000e+00> : vector<16x32xf32>
    %10 = tpu.matmul %8, %9, %cst_8 {dimension_numbers = #tpu.dot_dimension_numbers<[1], [0], [0], [1], [0, 0, 1, 1], [], []>} : vector<16x32xbf16>, vector<32x32xbf16>, vector<16x32xf32> -> vector<16x32xf32>
    %c0_9 = arith.constant 0 : index
    %c0_10 = arith.constant 0 : index
    %11 = vector.load %arg5[%c0_9, %c0_10] : memref<1x32xf32, #tpu.memory_space<vmem>>, vector<1x32xf32>
    %12 = vector.broadcast %11 : vector<1x32xf32> to vector<16x32xf32>
    %13 = arith.addf %10, %12 : vector<16x32xf32>
    %cst_11 = arith.constant 0.000000e+00 : f32
    %14 = vector.broadcast %cst_11 : f32 to vector<16x32xf32>
    %15 = arith.maximumf %13, %14 : vector<16x32xf32>
    %16 = arith.truncf %15 : vector<16x32xf32> to vector<16x32xbf16>
    %c0_12 = arith.constant 0 : index
    %c0_13 = arith.constant 0 : index
    %17 = vector.load %arg6[%c0_12, %c0_13] : memref<32x8xbf16, #tpu.memory_space<vmem>>, vector<32x8xbf16>
    %cst_14 = arith.constant dense<0.000000e+00> : vector<16x8xf32>
    %18 = tpu.matmul %16, %17, %cst_14 {dimension_numbers = #tpu.dot_dimension_numbers<[1], [0], [0], [1], [0, 0, 1, 1], [], []>} : vector<16x32xbf16>, vector<32x8xbf16>, vector<16x8xf32> -> vector<16x8xf32>
    %c0_15 = arith.constant 0 : index
    %c0_16 = arith.constant 0 : index
    %19 = vector.load %arg7[%c0_15, %c0_16] : memref<1x8xf32, #tpu.memory_space<vmem>>, vector<1x8xf32>
    %20 = vector.broadcast %19 : vector<1x8xf32> to vector<16x8xf32>
    %21 = arith.addf %18, %20 : vector<16x8xf32>
    %c0_17 = arith.constant 0 : index
    %c0_18 = arith.constant 0 : index
    %22 = vector.load %arg8[%c0_17, %c0_18] : memref<16x8xf32, #tpu.memory_space<vmem>>, vector<16x8xf32>
    tpu.vector_store %arg8[%c0_17, %c0_18], %21 {strides = array<i32>} : memref<16x8xf32, #tpu.memory_space<vmem>>, vector<16x8xf32>,
    return
  }
  func.func @transform_0(%arg0: i32) -> (i32, i32) {
    %c0_i32 = arith.constant 0 : i32
    %c0_i32_0 = arith.constant 0 : i32
    return %arg0, %c0_i32 : i32, i32
  }
  func.func @transform_1(%arg0: i32) -> (i32, i32) {
    %c0_i32 = arith.constant 0 : i32
    %c0_i32_0 = arith.constant 0 : i32
    %c0_i32_1 = arith.constant 0 : i32
    return %c0_i32, %c0_i32_0 : i32, i32
  }
  func.func @transform_2(%arg0: i32) -> (i32, i32) {
    %c0_i32 = arith.constant 0 : i32
    %c0_i32_0 = arith.constant 0 : i32
    %c0_i32_1 = arith.constant 0 : i32
    return %c0_i32, %c0_i32_0 : i32, i32
  }
  func.func @transform_3(%arg0: i32) -> (i32, i32) {
    %c0_i32 = arith.constant 0 : i32
    %c0_i32_0 = arith.constant 0 : i32
    %c0_i32_1 = arith.constant 0 : i32
    return %c0_i32, %c0_i32_0 : i32, i32
  }
  func.func @transform_4(%arg0: i32) -> (i32, i32) {
    %c0_i32 = arith.constant 0 : i32
    %c0_i32_0 = arith.constant 0 : i32
    %c0_i32_1 = arith.constant 0 : i32
    return %c0_i32, %c0_i32_0 : i32, i32
  }
  func.func @transform_5(%arg0: i32) -> (i32, i32) {
    %c0_i32 = arith.constant 0 : i32
    %c0_i32_0 = arith.constant 0 : i32
    %c0_i32_1 = arith.constant 0 : i32
    return %c0_i32, %c0_i32_0 : i32, i32
  }
  func.func @transform_6(%arg0: i32) -> (i32, i32) {
    %c0_i32 = arith.constant 0 : i32
    %c0_i32_0 = arith.constant 0 : i32
    %c0_i32_1 = arith.constant 0 : i32
    return %c0_i32, %c0_i32_0 : i32, i32
  }
  func.func @transform_7(%arg0: i32) -> (i32, i32) {
    %c0_i32 = arith.constant 0 : i32
    %c0_i32_0 = arith.constant 0 : i32
    return %arg0, %c0_i32 : i32, i32
  }
}

</mosaic_0001>

<llo_original>
// kernel: tpu_custom_call.1
$region0: #{tpu_custom_call.1}
  #allocation0 [shape = 'u32[]', space=smem, size = 0x4, offset = 0x4, fixed_abs, tag = 'smem constant byte address 0x4 - core index']
  #allocation1 [shape = 'u32[144,128]{1,0:T(1,128)}', space=vmem, size = 0x12000, scoped, tag = 'internal scratch']
  %s0 = inlined_call_operand.vmem [shape: bf16[16,16], index: 0, kind: input, shape index: {}]
  %s1 = inlined_call_operand.hbm [shape: bf16[16,32], index: 1, kind: input, shape index: {}]
  %s2 = inlined_call_operand.vmem [shape: f32[1,32], index: 2, kind: input, shape index: {}]
  %s3 = inlined_call_operand.vmem [shape: bf16[32,32], index: 3, kind: input, shape index: {}]
  %s4 = inlined_call_operand.vmem [shape: f32[1,32], index: 4, kind: input, shape index: {}]
  %s5 = inlined_call_operand.vmem [shape: bf16[32,8], index: 5, kind: input, shape index: {}]
  %s6 = inlined_call_operand.vmem [shape: f32[1,8], index: 6, kind: input, shape index: {}]
  %s7 = inlined_call_operand.vmem [shape: f32[16,8], index: 7, kind: output, shape index: {}]
  %s8 = sld [smem:[#allocation0]]
  $region42: #{tpu_custom_call.1} parent=0
    _
  %s10 = ssub.s32 1, %s8
  %s11 = scalar_select 0, %s10, %s8
  $region1: #{tpu_custom_call.1} parent=0
    #allocation2 [shape = 'u8[4096]{0}', space=vmem, size = 0x1000, scoped, tag = 'input window, operand 1, single buffered']
    #allocation3 [shape = 's32[1]{0}', space=sflag, size = 0x4, scoped, tag = 'scoped memory for tpu_custom_call.1']
    %12 = vsyncpa [#allocation3], 0
    // Predicated region
    $region2: #{tpu_custom_call.1} parent=1 // pred_check
      _
    $region3: #{tpu_custom_call.1} parent=1 // pred_check_branch
      %14 = sbr.rel (0) target = $region5
    $region4: #{tpu_custom_call.1} parent=1 // pred_region
      _
    $region5: #{tpu_custom_call.1} parent=1 // pred_fallthru
      _
    // Predicated region
    $region6: #{tpu_custom_call.1} parent=1 // pred_check
      _
    $region7: #{tpu_custom_call.1} parent=1 // pred_check_branch
      %16 = sbr.rel (0) target = $region9
    $region8: #{tpu_custom_call.1} parent=1 // pred_region
      %s18 = ssub.s32 128, 128
      %19 = vsyncadd [#allocation3], %s18
      %s20 = sshll.u32 [#allocation2], 4
      %s21 = int_to_ptr.vmem [resolvable:$true] %s20
      %26 = dma.hbm_to_vmem [thread:$0]  %s1, 128, %s21, [#allocation3], 64, 64, 4
    $region9: #{tpu_custom_call.1} parent=1 // pred_fallthru
      _
    // Predicated region
    $region10: #{tpu_custom_call.1} parent=1 // pred_check
      _
    $region11: #{tpu_custom_call.1} parent=1 // pred_check_branch
      %28 = sbr.rel (0) target = $region13
    $region12: #{tpu_custom_call.1} parent=1 // pred_region
      _
    $region13: #{tpu_custom_call.1} parent=1 // pred_fallthru
      _
    // Predicated region
    $region14: #{tpu_custom_call.1} parent=1 // pred_check
      _
    $region15: #{tpu_custom_call.1} parent=1 // pred_check_branch
      %30 = sbr.rel (0) target = $region17
    $region16: #{tpu_custom_call.1} parent=1 // pred_region
      _
    $region17: #{tpu_custom_call.1} parent=1 // pred_fallthru
      _
    // Predicated region
    $region18: #{tpu_custom_call.1} parent=1 // pred_check
      _
    $region19: #{tpu_custom_call.1} parent=1 // pred_check_branch
      %32 = sbr.rel (0) target = $region21
    $region20: #{tpu_custom_call.1} parent=1 // pred_region
      _
    $region21: #{tpu_custom_call.1} parent=1 // pred_fallthru
      _
    // Predicated region
    $region22: #{tpu_custom_call.1} parent=1 // pred_check
      _
    $region23: #{tpu_custom_call.1} parent=1 // pred_check_branch
      %34 = sbr.rel (0) target = $region25
    $region24: #{tpu_custom_call.1} parent=1 // pred_region
      _
    $region25: #{tpu_custom_call.1} parent=1 // pred_fallthru
      _
    // Predicated region
    $region26: #{tpu_custom_call.1} parent=1 // pred_check
      _
    $region27: #{tpu_custom_call.1} parent=1 // pred_check_branch
      %36 = sbr.rel (0) target = $region29
    $region28: #{tpu_custom_call.1} parent=1 // pred_region
      _
    $region29: #{tpu_custom_call.1} parent=1 // pred_fallthru
      _
    // Predicated region
    $region30: #{tpu_custom_call.1} parent=1 // pred_check
      _
    $region31: #{tpu_custom_call.1} parent=1 // pred_check_branch
      %38 = sbr.rel (0) target = $region33
    $region32: #{tpu_custom_call.1} parent=1 // pred_region
      %39 = dma.done [#allocation3], 128
    $region33: #{tpu_custom_call.1} parent=1 // pred_fallthru
      _
    %v41 = vld [vmem:[%s0] sm:$0xf]
    %v42 = vld [vmem:[%s0 + $0x4] sm:$0xf]
    %v43 = vld [vmem:[#allocation2] sm:$0xf]
    %v44 = vld [vmem:[#allocation2 + $0x4] sm:$0xf]
    %v45 = vld [vmem:[%s2] sm:$0x1]
    %v47 = vlaneseq
    %v48 = vshrl.u32 %v47, 7
    %v49 = vsub.s32 0, %v48
    %v50 = vrot.slane %v45, %v49
    %v54 = vunpack.c.l.b16 %v41
    %v55 = vunpack.c.l.b16 %v42
    %v56 = vpack.c.b16 %v55, %v54
    %v59 = vunpack.c.l.b16 %v43
    %v60 = vunpack.c.l.b16 %v44
    %v61 = vpack.c.b16 %v60, %v59
    %vm63 = vcmask 130048
    %v65 = vsel %vm63, %v56, 0
    %67 = vmatprep.subr.bf16.mxu0 0
    %68 = vmatpush1.bf16.msra.mxu0 %v61
    %69 = vmatprep.subr.bf16.mxu0 0
    %70 = vmatpush1.bf16.msra.mxu0 0
    %71 = vmatprep.subr.bf16.mxu0 0
    %72 = vmatpush1.bf16.msra.mxu0 0
    %73 = vmatprep.subr.bf16.mxu0 0
    %74 = vmatpush1.bf16.msra.mxu0 0
    %75 = vmatprep.subr.bf16.mxu0 0
    %76 = vmatpush1.bf16.msra.mxu0 0
    %77 = vmatprep.subr.bf16.mxu0 0
    %78 = vmatpush1.bf16.msra.mxu0 0
    %79 = vmatprep.subr.bf16.mxu0 0
    %80 = vmatpush1.bf16.msra.mxu0 0
    %81 = vmatprep.subr.bf16.mxu0 0
    %82 = vmatpush1.bf16.msra.mxu0 0
    %83 = vmatprep.subr.bf16.mxu0 0
    %84 = vmatpush1.bf16.msra.mxu0 0
    %85 = vmatprep.subr.bf16.mxu0 0
    %86 = vmatpush1.bf16.msra.mxu0 0
    %87 = vmatprep.subr.bf16.mxu0 0
    %88 = vmatpush1.bf16.msra.mxu0 0
    %89 = vmatprep.subr.bf16.mxu0 0
    %90 = vmatpush1.bf16.msra.mxu0 0
    %91 = vmatprep.subr.bf16.mxu0 0
    %92 = vmatpush1.bf16.msra.mxu0 0
    %93 = vmatprep.subr.bf16.mxu0 0
    %94 = vmatpush1.bf16.msra.mxu0 0
    %95 = vmatprep.subr.bf16.mxu0 0
    %96 = vmatpush1.bf16.msra.mxu0 0
    %97 = vmatprep.subr.bf16.mxu0 0
    %98 = vmatpush1.bf16.msra.mxu0 0
    %99 = vmatprep.mubr.bf16.mxu0 0
    %100 = vmatmul.mubr.bf16.gmra.mrb[0].mxu0 %v65
    %v101 = vpop.f32.mrb[0].mxu0
    %v102 = vadd.f32 %v50, %v101
    %v103 = vpop.f32.mrb[0].mxu0
    %v104 = vpop.f32.mrb[0].mxu0
    %v105 = vadd.f32 %v50, %v104
    %v106 = vpop.f32.mrb[0].mxu0
    %107 = vdwg.mxu0
    %v108 = vmax.f32 %v102, 0.0
    %v109 = vmax.f32 %v105, 0.0
    %v110 = vpack.c.bf16 %v109, %v108
    %v111 = vld [vmem:[%s3] sm:$0xf]
    %v112 = vld [vmem:[%s3 + $0x4] sm:$0xf]
    %v113 = vld [vmem:[%s3 + $0x8] sm:$0xf]
    %v114 = vld [vmem:[%s3 + $0xc] sm:$0xf]
    %v115 = vld [vmem:[%s4] sm:$0x1]
    %v117 = vlaneseq
    %v118 = vshrl.u32 %v117, 7
    %v119 = vsub.s32 0, %v118
    %v120 = vrot.slane %v115, %v119
    %v126 = vunpack.c.l.b16 %v111
    %v127 = vunpack.c.l.b16 %v112
    %v128 = vunpack.c.l.b16 %v113
    %v129 = vunpack.c.l.b16 %v114
    %v130 = vpack.c.b16 %v127, %v126
    %v131 = vpack.c.b16 %v129, %v128
    %vm134 = vcmask 261120
    %v136 = vsel %vm134, %v110, 0
    %138 = vmatprep.subr.bf16.mxu0 0
    %139 = vmatpush1.bf16.msra.mxu0 %v130
    %140 = vmatprep.subr.bf16.mxu0 0
    %141 = vmatpush1.bf16.msra.mxu0 %v131
    %142 = vmatprep.subr.bf16.mxu0 0
    %143 = vmatpush1.bf16.msra.mxu0 0
    %144 = vmatprep.subr.bf16.mxu0 0
    %145 = vmatpush1.bf16.msra.mxu0 0
    %146 = vmatprep.subr.bf16.mxu0 0
    %147 = vmatpush1.bf16.msra.mxu0 0
    %148 = vmatprep.subr.bf16.mxu0 0
    %149 = vmatpush1.bf16.msra.mxu0 0
    %150 = vmatprep.subr.bf16.mxu0 0
    %151 = vmatpush1.bf16.msra.mxu0 0
    %152 = vmatprep.subr.bf16.mxu0 0
    %153 = vmatpush1.bf16.msra.mxu0 0
    %154 = vmatprep.subr.bf16.mxu0 0
    %155 = vmatpush1.bf16.msra.mxu0 0
    %156 = vmatprep.subr.bf16.mxu0 0
    %157 = vmatpush1.bf16.msra.mxu0 0
    %158 = vmatprep.subr.bf16.mxu0 0
    %159 = vmatpush1.bf16.msra.mxu0 0
    %160 = vmatprep.subr.bf16.mxu0 0
    %161 = vmatpush1.bf16.msra.mxu0 0
    %162 = vmatprep.subr.bf16.mxu0 0
    %163 = vmatpush1.bf16.msra.mxu0 0
    %164 = vmatprep.subr.bf16.mxu0 0
    %165 = vmatpush1.bf16.msra.mxu0 0
    %166 = vmatprep.subr.bf16.mxu0 0
    %167 = vmatpush1.bf16.msra.mxu0 0
    %168 = vmatprep.subr.bf16.mxu0 0
    %169 = vmatpush1.bf16.msra.mxu0 0
    %170 = vmatprep.mubr.bf16.mxu0 0
    %171 = vmatmul.mubr.bf16.gmra.mrb[0].mxu0 %v136
    %v172 = vpop.f32.mrb[0].mxu0
    %v173 = vadd.f32 %v120, %v172
    %v174 = vpop.f32.mrb[0].mxu0
    %v175 = vpop.f32.mrb[0].mxu0
    %v176 = vadd.f32 %v120, %v175
    %v177 = vpop.f32.mrb[0].mxu0
    %178 = vdwg.mxu0
    %v179 = vmax.f32 %v173, 0.0
    %v180 = vmax.f32 %v176, 0.0
    %v181 = vpack.c.bf16 %v180, %v179
    %v182 = vld [vmem:[%s5] sm:$0xf]
    %v183 = vld [vmem:[%s5 + $0x4] sm:$0xf]
    %v184 = vld [vmem:[%s5 + $0x8] sm:$0xf]
    %v185 = vld [vmem:[%s5 + $0xc] sm:$0xf]
    %v186 = vld [vmem:[%s6] sm:$0x1]
    %v188 = vlaneseq
    %v189 = vshrl.u32 %v188, 7
    %v190 = vsub.s32 0, %v189
    %v191 = vrot.slane %v186, %v190
    %v197 = vunpack.c.l.b16 %v182
    %v198 = vunpack.c.l.b16 %v183
    %v199 = vunpack.c.l.b16 %v184
    %v200 = vunpack.c.l.b16 %v185
    %v201 = vpack.c.b16 %v198, %v197
    %v202 = vpack.c.b16 %v200, %v199
    %v206 = vsel %vm134, %v181, 0
    %208 = vmatprep.subr.bf16.mxu0 0
    %209 = vmatpush1.bf16.msra.mxu0 %v201
    %210 = vmatprep.subr.bf16.mxu0 0
    %211 = vmatpush1.bf16.msra.mxu0 %v202
    %212 = vmatprep.subr.bf16.mxu0 0
    %213 = vmatpush1.bf16.msra.mxu0 0
    %214 = vmatprep.subr.bf16.mxu0 0
    %215 = vmatpush1.bf16.msra.mxu0 0
    %216 = vmatprep.subr.bf16.mxu0 0
    %217 = vmatpush1.bf16.msra.mxu0 0
    %218 = vmatprep.subr.bf16.mxu0 0
    %219 = vmatpush1.bf16.msra.mxu0 0
    %220 = vmatprep.subr.bf16.mxu0 0
    %221 = vmatpush1.bf16.msra.mxu0 0
    %222 = vmatprep.subr.bf16.mxu0 0
    %223 = vmatpush1.bf16.msra.mxu0 0
    %224 = vmatprep.subr.bf16.mxu0 0
    %225 = vmatpush1.bf16.msra.mxu0 0
    %226 = vmatprep.subr.bf16.mxu0 0
    %227 = vmatpush1.bf16.msra.mxu0 0
    %228 = vmatprep.subr.bf16.mxu0 0
    %229 = vmatpush1.bf16.msra.mxu0 0
    %230 = vmatprep.subr.bf16.mxu0 0
    %231 = vmatpush1.bf16.msra.mxu0 0
    %232 = vmatprep.subr.bf16.mxu0 0
    %233 = vmatpush1.bf16.msra.mxu0 0
    %234 = vmatprep.subr.bf16.mxu0 0
    %235 = vmatpush1.bf16.msra.mxu0 0
    %236 = vmatprep.subr.bf16.mxu0 0
    %237 = vmatpush1.bf16.msra.mxu0 0
    %238 = vmatprep.subr.bf16.mxu0 0
    %239 = vmatpush1.bf16.msra.mxu0 0
    %240 = vmatprep.mubr.bf16.mxu0 0
    %241 = vmatmul.mubr.bf16.gmra.mrb[0].mxu0 %v206
    %v242 = vpop.f32.mrb[0].mxu0
    %v243 = vadd.f32 %v191, %v242
    %v244 = vpop.f32.mrb[0].mxu0
    %v245 = vpop.f32.mrb[0].mxu0
    %v246 = vadd.f32 %v191, %v245
    %v247 = vpop.f32.mrb[0].mxu0
    %248 = vdwg.mxu0
    %vm249 = vcmask 64512
    %250 = vst.msk [vmem:[%s7] sm:$0xff] %vm249, %v243
    %251 = vst.msk [vmem:[%s7 + $0x8] sm:$0xff] %vm249, %v246
    // Predicated region
    $region34: #{tpu_custom_call.1} parent=1 // pred_check
      _
    $region35: #{tpu_custom_call.1} parent=1 // pred_check_branch
      %253 = sbr.rel (0) target = $region37
    $region36: #{tpu_custom_call.1} parent=1 // pred_region
      _
    $region37: #{tpu_custom_call.1} parent=1 // pred_fallthru
      _
    // Predicated region
    $region38: #{tpu_custom_call.1} parent=1 // pred_check
      _
    $region39: #{tpu_custom_call.1} parent=1 // pred_check_branch
      %255 = sbr.rel (0) target = $region41
    $region40: #{tpu_custom_call.1} parent=1 // pred_region
      _
    $region41: #{tpu_custom_call.1} parent=1 // pred_fallthru
      _
    %256 = vsyncpa [#allocation3], 1

</llo_original>
